<compile_context>
chip_gen: v7x
topology: tpu7x:2x2x1
jax: 0.10.0
libtpu: 0.0.40
codegen_flags: <defaults>
</compile_context>

<pallas_src>
import functools

import jax
import jax.numpy as jnp
from jax.experimental import pallas as pl
from jax.experimental.pallas import tpu as pltpu

_NEG_BIG = -1e4                      # finite in f32/bf16/f16; exp(-1e4) underflows to 0 -> softplus == 0 exactly
_VMEM_LIMIT = 32 * 1024 * 1024       # scoped-VMEM request safe on v5e/v6e/v7x
_ROW_TILE_BYTES = 2 * 1024 * 1024    # target input bytes per grid step (logits + lane-padded targets)
_MAX_ROW_TILE = 4096                 # sublane rows per block
_MIN_ROW_TILE = 512                  # measured: ~512-row tiles already reach ~85% of HBM roofline
_MIN_GRID = 4                        # keep >= 4 blocks so v7x's two TensorCores both get work
_PACK_WIDTHS = (8, 16, 32, 64)       # class widths we lane-pack to (pack = 128//w stays <= 16)


def _round_up(a, b):
    return (a + b - 1) // b * b


def _device_kind():
    try:
        return jax.devices()[0].device_kind.lower()
    except Exception:
        return ""


def _is_v5e_or_older():
    kind = _device_kind()
    return any(tag in kind for tag in ("v2", "v3", "v4", "v5"))


def _default_transcendental_dtype():
    """bf16 EUP exp on v6e/v7x; f32 on v5e and older (no bf16 EUP, HBM-bound anyway)."""
    return jnp.float32 if _is_v5e_or_older() else jnp.bfloat16


def _choose_row_tile(rows_total, per_row_bytes, gran):
    """Largest `gran`-aligned row tile that (a) stays near _ROW_TILE_BYTES of input per
    step, (b) leaves >= _MIN_GRID blocks for v7x's two TCs when the problem allows,
    and (c) never exceeds the array (partial block only at the ragged tail)."""
    if rows_total <= gran:
        return rows_total                      # single block == full sublane extent (allowed)
    tn = max(gran, (_ROW_TILE_BYTES // max(per_row_bytes, 1)) // gran * gran)
    tn = min(tn, _MAX_ROW_TILE)
    tn = min(tn, max(_MIN_ROW_TILE, _round_up(pl.cdiv(rows_total, _MIN_GRID), gran)))
    tn = min(tn, rows_total // gran * gran)
    return max(tn, gran)


def _softplus_neg_abs(x_f32, transcendental_dtype):
    """log(1 + exp(-|x|)).  Optionally evaluate only the exp in bf16 on the EUP
    (v6e/v7x); log1p / accumulation stay f32 so |x|>~5.5 is not biased to exactly 0."""
    ax = jnp.abs(x_f32)
    if jnp.dtype(transcendental_dtype) == jnp.dtype(jnp.float32):
        return jnp.log1p(jnp.exp(-ax))
    e = jnp.exp((-ax).astype(transcendental_dtype)).astype(jnp.float32)
    return jnp.log1p(e)


def _mlce_natural_kernel(x_ref, t_ref, out_ref, *, tn, rows_total, mask_tail,
                         transcendental_dtype):
    """Natural (rows, C) layout: one sample per sublane row (used for wide / awkward C)."""
    x = x_ref[...].astype(jnp.float32)                 # (tn, C)
    t = t_ref[...]                                     # (tn, 1) int32 class index
    cls = jax.lax.broadcasted_iota(jnp.int32, x.shape, 1)
    y = (cls == t).astype(jnp.float32)                 # one-hot target
    # numerically stable BCE-with-logits, UNWEIGHTED: the per-class weight is applied to
    # the tiny per-block partials in the wrapper (sum_r(w_c*per_rc) == w_c*sum_r(per_rc)).
    per = jnp.maximum(x, 0.0) - x * y + _softplus_neg_abs(x, transcendental_dtype)
    if mask_tail:
        rows = jax.lax.broadcasted_iota(jnp.int32, x.shape, 0)
        valid = rows_total - pl.program_id(0) * tn     # rows_total/tn are static Python ints
        per = jnp.where(rows < valid, per, 0.0)        # select: OOB garbage (even NaN) dropped
    # TODO(synk): if VALU-bound on v7x, offload this row reduce to the idle MXU via
    # jnp.dot(ones((1, tn)), per, preferred_element_type=f32).
    out_ref[...] = jnp.sum(per, axis=0, keepdims=True)[None]       # (1, 1, C)


def _mlce_packed_kernel(x_ref, t_ref, out_ref, *, pack, tn, rows_total, mask_tail,
                        transcendental_dtype):
    """Lane-dense layout: each 128-lane row holds `pack` samples of 128//pack classes.
    Targets arrive pre-converted to lane indices (class + slot*C_pad), so expansion is
    just `pack` compares + ors against one lane iota (no integer divide / select chain)."""
    x = x_ref[...].astype(jnp.float32)                 # (tn, 128)
    t = t_ref[...]                                     # (tn, pack) int32 lane indices (-1 = pad)
    lanes = jax.lax.broadcasted_iota(jnp.int32, x.shape, 1)
    match = lanes == t[:, 0:1]
    for j in range(1, pack):
        match = match | (lanes == t[:, j:j + 1])
    y = match.astype(jnp.float32)
    per = jnp.maximum(x, 0.0) - x * y + _softplus_neg_abs(x, transcendental_dtype)
    if mask_tail:
        rows = jax.lax.broadcasted_iota(jnp.int32, x.shape, 0)
        valid = rows_total - pl.program_id(0) * tn
        per = jnp.where(rows < valid, per, 0.0)
    out_ref[...] = jnp.sum(per, axis=0, keepdims=True)[None]       # (1, 1, 128)


def multi_label_ce(logits: jax.Array, targets: jax.Array, weight: jax.Array = None, *,
                   transcendental_dtype=None, force_natural: bool = False):
    """Pallas equivalent of MultiLabelCE.forward(logits, targets)."""
    N, C = logits.shape
    if weight is None:
        weight = jnp.ones((C,), jnp.float32)           # module default
    w = jnp.asarray(weight, jnp.float32)
    if w.shape != (C,):
        raise ValueError(f"weight must be a per-class vector of shape ({C},), got {w.shape}")
    if transcendental_dtype is None:
        transcendental_dtype = _default_transcendental_dtype()

    x = logits                                         # keep native dtype (bf16 halves HBM read)
    t = jnp.asarray(targets, jnp.int32).reshape(N)
    itemsize = jnp.dtype(x.dtype).itemsize
    gran = 8 if itemsize >= 4 else (16 if itemsize == 2 else 32)   # sublane tiling granularity

    compiler_params = pltpu.CompilerParams(
        dimension_semantics=("parallel",),             # independent per-block partials
        vmem_limit_bytes=_VMEM_LIMIT)

    # Lane-dense packing: smallest divisor of 128 that is >= C and >= 8 (so the target
    # expansion unroll stays <= 16).  Widening the class axis costs one wrapper pad pass,
    # so only do it where the kernel is compute-bound (v6e/v7x); on v5e pack only if C
    # already matches a pack width.
    c_pad = next((d for d in _PACK_WIDTHS if d >= C), None)
    class_pad_ok = (c_pad is not None) and (c_pad == C or not _is_v5e_or_older())
    use_packed = (not force_natural) and class_pad_ok
    # TODO(synk): for very small C (<8) on v7x, a uint8 one-hot sidecar built in the
    # wrapper would beat both paths (VALU-bound there); not implemented here.

    if use_packed:
        pack = 128 // c_pad
        n_pad = _round_up(N, pack)
        if n_pad != N or c_pad != C:
            # single small pad pass (at most pack-1 extra samples / c_pad-C columns);
            # pad logit -1e4 contributes exactly zero loss, so no extra masking needed.
            x = jnp.pad(x, ((0, n_pad - N), (0, c_pad - C)),
                        constant_values=jnp.asarray(_NEG_BIG, dtype=x.dtype))
        rows = n_pad // pack
        x_p = x.reshape(rows, 128)                     # row-major reshape: free, lane-dense

        # precomputed lane-index targets (tiny int math on (N,) in the wrapper)
        offs = (jnp.arange(n_pad, dtype=jnp.int32) % pack) * c_pad
        t_full = jnp.pad(t, (0, n_pad - N)) if n_pad != N else t
        t_lane = jnp.where(jnp.arange(n_pad) < N, t_full + offs, -1).reshape(rows, pack)

        per_row_bytes = 128 * itemsize + 128 * 4       # logits row + lane-padded int32 target row
        tn = _choose_row_tile(rows, per_row_bytes, gran)
        grid = pl.cdiv(rows, tn)
        mask_tail = (rows % tn) != 0

        kernel = functools.partial(_mlce_packed_kernel, pack=pack, tn=tn,
                                   rows_total=rows, mask_tail=mask_tail,
                                   transcendental_dtype=transcendental_dtype)
        partials = pl.pallas_call(
            kernel,
            out_shape=jax.ShapeDtypeStruct((grid, 1, 128), jnp.float32),
            grid_spec=pltpu.PrefetchScalarGridSpec(
                num_scalar_prefetch=0,
                grid=(grid,),
                in_specs=[
                    pl.BlockSpec((tn, 128), lambda i: (i, 0)),      # packed logits tile
                    pl.BlockSpec((tn, pack), lambda i: (i, 0)),     # packed lane-index targets
                ],
                out_specs=pl.BlockSpec((1, 1, 128), lambda i: (i, 0, 0)),
            ),
            compiler_params=compiler_params,
        )(x_p, t_lane)

        col_sums = jnp.sum(partials, axis=(0, 1))                   # (128,) unweighted column sums
        w_lane = jnp.tile(jnp.pad(w, (0, c_pad - C)), pack)         # weight of lane l = w[l % c_pad]
        return jnp.dot(col_sums, w_lane) / (N * C)

    # ---------------- natural (rows, C) layout ----------------
    # TODO(synk): tile the class axis as well for extremely wide C (>~256K classes);
    # budget ~8 MiB logits tiles on v7x (32 MiB scoped VMEM) vs ~16 MiB on v5e/v6e, and
    # include the lane-padded (tn,1) int32 target block (tn*512 B per buffer) in that budget.
    per_row_bytes = _round_up(C, 128) * itemsize + 128 * 4
    tn = _choose_row_tile(N, per_row_bytes, gran)
    grid = pl.cdiv(N, tn)
    mask_tail = (N % tn) != 0

    kernel = functools.partial(_mlce_natural_kernel, tn=tn, rows_total=N,
                               mask_tail=mask_tail,
                               transcendental_dtype=transcendental_dtype)
    partials = pl.pallas_call(
        kernel,
        out_shape=jax.ShapeDtypeStruct((grid, 1, C), jnp.float32),
        grid_spec=pltpu.PrefetchScalarGridSpec(
            num_scalar_prefetch=0,
            grid=(grid,),
            in_specs=[
                pl.BlockSpec((tn, C), lambda i: (i, 0)),            # logits tile (native dtype)
                pl.BlockSpec((tn, 1), lambda i: (i, 0)),            # target index tile
            ],
            out_specs=pl.BlockSpec((1, 1, C), lambda i: (i, 0, 0)),
        ),
        compiler_params=compiler_params,
    )(x, t.reshape(N, 1))

    col_sums = jnp.sum(partials, axis=(0, 1))                       # (C,) unweighted class sums
    return jnp.dot(col_sums, w) / (N * C)


def multi_label_ce_ref(logits, targets, weight):
    """Pure-JAX reference (mirrors torch BCEWithLogitsLoss(weight, reduction='mean'))."""
    N, C = logits.shape
    x = logits.astype(jnp.float32)
    y = jax.nn.one_hot(targets, C, dtype=jnp.float32)
    per = jnp.maximum(x, 0.0) - x * y + jnp.log1p(jnp.exp(-jnp.abs(x)))
    return jnp.sum(per * weight.reshape(1, C)) / (N * C)


if __name__ == "__main__":
    key = jax.random.PRNGKey(0)
    k1, k2, k3, k4, k5, k6 = jax.random.split(key, 6)

    auto_tdt = _default_transcendental_dtype()
    loose = jnp.dtype(auto_tdt) != jnp.dtype(jnp.float32)
    rtol_auto = 1e-2 if loose else 1e-5
    atol_auto = 1e-3 if loose else 1e-6

    # Case 1: C divides 128 -> lane-dense packed path with zero wrapper-side copies.
    n1, c1 = 16, 16
    logits1 = jax.random.normal(k1, (n1, c1), dtype=jnp.float32)
    targets1 = jax.random.randint(k2, (n1,), 0, c1, dtype=jnp.int32)
    weight1 = jnp.linspace(0.5, 1.5, c1, dtype=jnp.float32)
    ref1 = multi_label_ce_ref(logits1, targets1, weight1)
    loss1 = jax.block_until_ready(
        multi_label_ce(logits1, targets1, weight1, transcendental_dtype=jnp.float32))
    assert jnp.allclose(loss1, ref1, rtol=1e-5, atol=1e-6), (loss1, ref1)
    loss1b = jax.block_until_ready(multi_label_ce(logits1, targets1, weight1))
    assert jnp.allclose(loss1b, ref1, rtol=rtol_auto, atol=atol_auto), (loss1b, ref1)

    # Case 2: ragged N, C does not divide 128 -> class-padded packed path (v6e/v7x) or
    # natural path (v5e); also force the natural path explicitly with f32 EUP.
    n2, c2 = 21, 20
    logits2 = jax.random.normal(k3, (n2, c2), dtype=jnp.float32)
    targets2 = jax.random.randint(k4, (n2,), 0, c2, dtype=jnp.int32)
    weight2 = jnp.ones((c2,), dtype=jnp.float32)          # module default weight
    ref2 = multi_label_ce_ref(logits2, targets2, weight2)
    loss2 = jax.block_until_ready(multi_label_ce(logits2, targets2, weight2))
    assert jnp.allclose(loss2, ref2, rtol=rtol_auto, atol=atol_auto), (loss2, ref2)
    loss2n = jax.block_until_ready(
        multi_label_ce(logits2, targets2, weight2, transcendental_dtype=jnp.float32,
                       force_natural=True))
    assert jnp.allclose(loss2n, ref2, rtol=1e-5, atol=1e-6), (loss2n, ref2)

    # Case 3: bf16 logits flow into the kernel in their native dtype; ragged tile tail.
    n3, c3 = 300, 30
    logits3 = jax.random.normal(k5, (n3, c3), dtype=jnp.float32).astype(jnp.bfloat16)
    targets3 = jax.random.randint(k6, (n3,), 0, c3, dtype=jnp.int32)
    weight3 = jnp.linspace(0.25, 2.0, c3, dtype=jnp.float32)
    ref3 = multi_label_ce_ref(logits3.astype(jnp.float32), targets3, weight3)
    loss3 = jax.block_until_ready(multi_label_ce(logits3, targets3, weight3))
    assert jnp.allclose(loss3, ref3, rtol=rtol_auto, atol=atol_auto), (loss3, ref3)

    print("KERNEL_OK")
</pallas_src>

<mosaic_0001>
module attributes {stable_mosaic.version = 11 : i64} {
  func.func @_mlce_packed_kernel(%arg0: i32, %arg1: memref<2x128xf32, #tpu.memory_space<vmem>>, %arg2: memref<2x8xi32, #tpu.memory_space<vmem>>, %arg3: memref<1x1x128xf32, #tpu.memory_space<vmem>>) attributes {dimension_semantics = [#tpu.dimension_semantics<parallel>], iteration_bounds = array<i64: 1>, scalar_prefetch = 0 : i64, scratch_operands = 0 : i64, tpu.core_type = #tpu.core_type<tc>, window_params = [{transform_indices = @transform_0, window_bounds = array<i64: 2, 128>}, {transform_indices = @transform_1, window_bounds = array<i64: 2, 8>}, {transform_indices = @transform_2, window_bounds = array<i64: 1, 1, 128>}]} {
    %c0 = arith.constant 0 : index
    %c0_0 = arith.constant 0 : index
    %0 = vector.load %arg1[%c0, %c0_0] : memref<2x128xf32, #tpu.memory_space<vmem>>, vector<2x128xf32>
    %c0_1 = arith.constant 0 : index
    %c0_2 = arith.constant 0 : index
    %1 = vector.load %arg2[%c0_1, %c0_2] : memref<2x8xi32, #tpu.memory_space<vmem>>, vector<2x8xi32>
    %2 = tpu.iota {dimensions = array<i32: 1>} : vector<2x128xi32>
    %3 = vector.extract_strided_slice %1 {offsets = [0, 0], sizes = [2, 1], strides = [1, 1]} : vector<2x8xi32> to vector<2x1xi32>
    %4 = vector.broadcast %3 : vector<2x1xi32> to vector<2x128xi32>
    %5 = arith.cmpi eq, %2, %4 : vector<2x128xi32>
    %6 = vector.extract_strided_slice %1 {offsets = [0, 1], sizes = [2, 1], strides = [1, 1]} : vector<2x8xi32> to vector<2x1xi32>
    %7 = vector.broadcast %6 : vector<2x1xi32> to vector<2x128xi32>
    %8 = arith.cmpi eq, %2, %7 : vector<2x128xi32>
    %9 = arith.ori %5, %8 : vector<2x128xi1>
    %10 = vector.extract_strided_slice %1 {offsets = [0, 2], sizes = [2, 1], strides = [1, 1]} : vector<2x8xi32> to vector<2x1xi32>
    %11 = vector.broadcast %10 : vector<2x1xi32> to vector<2x128xi32>
    %12 = arith.cmpi eq, %2, %11 : vector<2x128xi32>
    %13 = arith.ori %9, %12 : vector<2x128xi1>
    %14 = vector.extract_strided_slice %1 {offsets = [0, 3], sizes = [2, 1], strides = [1, 1]} : vector<2x8xi32> to vector<2x1xi32>
    %15 = vector.broadcast %14 : vector<2x1xi32> to vector<2x128xi32>
    %16 = arith.cmpi eq, %2, %15 : vector<2x128xi32>
    %17 = arith.ori %13, %16 : vector<2x128xi1>
    %18 = vector.extract_strided_slice %1 {offsets = [0, 4], sizes = [2, 1], strides = [1, 1]} : vector<2x8xi32> to vector<2x1xi32>
    %19 = vector.broadcast %18 : vector<2x1xi32> to vector<2x128xi32>
    %20 = arith.cmpi eq, %2, %19 : vector<2x128xi32>
    %21 = arith.ori %17, %20 : vector<2x128xi1>
    %22 = vector.extract_strided_slice %1 {offsets = [0, 5], sizes = [2, 1], strides = [1, 1]} : vector<2x8xi32> to vector<2x1xi32>
    %23 = vector.broadcast %22 : vector<2x1xi32> to vector<2x128xi32>
    %24 = arith.cmpi eq, %2, %23 : vector<2x128xi32>
    %25 = arith.ori %21, %24 : vector<2x128xi1>
    %26 = vector.extract_strided_slice %1 {offsets = [0, 6], sizes = [2, 1], strides = [1, 1]} : vector<2x8xi32> to vector<2x1xi32>
    %27 = vector.broadcast %26 : vector<2x1xi32> to vector<2x128xi32>
    %28 = arith.cmpi eq, %2, %27 : vector<2x128xi32>
    %29 = arith.ori %25, %28 : vector<2x128xi1>
    %30 = vector.extract_strided_slice %1 {offsets = [0, 7], sizes = [2, 1], strides = [1, 1]} : vector<2x8xi32> to vector<2x1xi32>
    %31 = vector.broadcast %30 : vector<2x1xi32> to vector<2x128xi32>
    %32 = arith.cmpi eq, %2, %31 : vector<2x128xi32>
    %33 = arith.ori %29, %32 : vector<2x128xi1>
    %34 = arith.extui %33 : vector<2x128xi1> to vector<2x128xi32>
    %35 = arith.sitofp %34 : vector<2x128xi32> to vector<2x128xf32>
    %cst = arith.constant 0.000000e+00 : f32
    %36 = vector.broadcast %cst : f32 to vector<2x128xf32>
    %37 = arith.maximumf %0, %36 : vector<2x128xf32>
    %38 = arith.mulf %0, %35 : vector<2x128xf32>
    %39 = arith.subf %37, %38 : vector<2x128xf32>
    %40 = math.absf %0 : vector<2x128xf32>
    %cst_3 = arith.constant 0.000000e+00 : f32
    %41 = vector.broadcast %cst_3 : f32 to vector<2x128xf32>
    %42 = arith.subf %41, %40 : vector<2x128xf32>
    %43 = math.exp %42 : vector<2x128xf32>
    %44 = math.log1p %43 : vector<2x128xf32>
    %45 = arith.addf %39, %44 : vector<2x128xf32>
    %cst_4 = arith.constant dense<0.000000e+00> : vector<128xf32>
    %46 = vector.multi_reduction <add>, %45, %cst_4 [0] : vector<2x128xf32> to vector<128xf32>
    %47 = vector.shape_cast %46 : vector<128xf32> to vector<1x128xf32>
    %48 = vector.shape_cast %47 : vector<1x128xf32> to vector<1x1x128xf32>
    %c0_5 = arith.constant 0 : index
    %c0_6 = arith.constant 0 : index
    %c0_7 = arith.constant 0 : index
    %49 = vector.load %arg3[%c0_5, %c0_6, %c0_7] : memref<1x1x128xf32, #tpu.memory_space<vmem>>, vector<1x1x128xf32>
    tpu.vector_store %arg3[%c0_5, %c0_6, %c0_7], %48 {strides = array<i32>} : memref<1x1x128xf32, #tpu.memory_space<vmem>>, vector<1x1x128xf32>,
    return
  }
  func.func @transform_0(%arg0: i32) -> (i32, i32) {
    %c0_i32 = arith.constant 0 : i32
    %c0_i32_0 = arith.constant 0 : i32
    return %arg0, %c0_i32 : i32, i32
  }
  func.func @transform_1(%arg0: i32) -> (i32, i32) {
    %c0_i32 = arith.constant 0 : i32
    %c0_i32_0 = arith.constant 0 : i32
    return %arg0, %c0_i32 : i32, i32
  }
  func.func @transform_2(%arg0: i32) -> (i32, i32, i32) {
    %c0_i32 = arith.constant 0 : i32
    %c0_i32_0 = arith.constant 0 : i32
    %c0_i32_1 = arith.constant 0 : i32
    return %arg0, %c0_i32, %c0_i32_0 : i32, i32, i32
  }
}

</mosaic_0001>

<llo_original>
// kernel: tpu_custom_call.1
$region0: #{tpu_custom_call.1}
  #allocation0 [shape = 'u32[]', space=smem, size = 0x4, offset = 0x4, fixed_abs, tag = 'smem constant byte address 0x4 - core index']
  #allocation1 [shape = 'u32[144,128]{1,0:T(1,128)}', space=vmem, size = 0x12000, scoped, tag = 'internal scratch']
  %s0 = inlined_call_operand.hbm [shape: f32[2,128], index: 0, kind: input, shape index: {}]
  %s1 = inlined_call_operand.vmem [shape: s32[2,8], index: 1, kind: input, shape index: {}]
  %s2 = inlined_call_operand.hbm [shape: f32[1,1,128], index: 2, kind: output, shape index: {}]
  %s3 = sld [smem:[#allocation0]]
  $region22: #{tpu_custom_call.1} parent=0
    _
  %s5 = ssub.s32 1, %s3
  %s6 = scalar_select 0, %s5, %s3
  $region1: #{tpu_custom_call.1} parent=0
    #allocation2 [shape = 'u8[1024]{0}', space=vmem, size = 0x400, scoped, tag = 'input window, operand 0, single buffered']
    #allocation3 [shape = 's32[1]{0}', space=sflag, size = 0x4, scoped, tag = 'scoped memory for tpu_custom_call.1']
    #allocation4 [shape = 's32[1]{0}', space=sflag, size = 0x4, scoped, tag = 'scoped memory for tpu_custom_call.1']
    #allocation5 [shape = 'u8[512]{0}', space=vmem, size = 0x400, scoped, tag = 'output window, operand 0, single buffered']
    %7 = vsyncpa [#allocation3], 0
    %8 = vsyncpa [#allocation4], 0
    // Predicated region
    $region2: #{tpu_custom_call.1} parent=1 // pred_check
      _
    $region3: #{tpu_custom_call.1} parent=1 // pred_check_branch
      %10 = sbr.rel (0) target = $region5
    $region4: #{tpu_custom_call.1} parent=1 // pred_region
      %s12 = ssub.s32 32, 32
      %13 = vsyncadd [#allocation3], %s12
      %s15 = sshll.u32 [#allocation2], 4
      %s16 = int_to_ptr.vmem [resolvable:$true] %s15
      %18 = dma.hbm_to_vmem [thread:$0]  %s0, 32, %s16, [#allocation3]
    $region5: #{tpu_custom_call.1} parent=1 // pred_fallthru
      _
    // Predicated region
    $region6: #{tpu_custom_call.1} parent=1 // pred_check
      _
    $region7: #{tpu_custom_call.1} parent=1 // pred_check_branch
      %20 = sbr.rel (0) target = $region9
    $region8: #{tpu_custom_call.1} parent=1 // pred_region
      _
    $region9: #{tpu_custom_call.1} parent=1 // pred_fallthru
      _
    // Predicated region
    $region10: #{tpu_custom_call.1} parent=1 // pred_check
      _
    $region11: #{tpu_custom_call.1} parent=1 // pred_check_branch
      %22 = sbr.rel (0) target = $region13
    $region12: #{tpu_custom_call.1} parent=1 // pred_region
      %23 = dma.done [#allocation3], 32
    $region13: #{tpu_custom_call.1} parent=1 // pred_fallthru
      _
    %v24 = vld [vmem:[#allocation2] sm:$0x3]
    %v25 = vld [vmem:[%s1] sm:$0x3]
    %v26 = vlaneseq
    %v27 = vand.u32 %v26, 127
    %28 = vset.pattern.permute.xlu0 0
    %29 = vperm.xlu0 %28, %v25
    %v30 = vpop.permute.xlu0 %29
    %vm31 = vcmp.eq.s32.totalorder %v27, %v30
    %32 = vset.pattern.permute.xlu0 1
    %33 = vperm.xlu0 %32, %v25
    %v34 = vpop.permute.xlu0 %33
    %vm35 = vcmp.eq.s32.totalorder %v27, %v34
    %vm36 = vmor %vm31, %vm35
    %37 = vset.pattern.permute.xlu0 2
    %38 = vperm.xlu0 %37, %v25
    %v39 = vpop.permute.xlu0 %38
    %vm40 = vcmp.eq.s32.totalorder %v27, %v39
    %vm41 = vmor %vm36, %vm40
    %42 = vset.pattern.permute.xlu0 3
    %43 = vperm.xlu0 %42, %v25
    %v44 = vpop.permute.xlu0 %43
    %vm45 = vcmp.eq.s32.totalorder %v27, %v44
    %vm46 = vmor %vm41, %vm45
    %47 = vset.pattern.permute.xlu0 4
    %48 = vperm.xlu0 %47, %v25
    %v49 = vpop.permute.xlu0 %48
    %vm50 = vcmp.eq.s32.totalorder %v27, %v49
    %vm51 = vmor %vm46, %vm50
    %52 = vset.pattern.permute.xlu0 5
    %53 = vperm.xlu0 %52, %v25
    %v54 = vpop.permute.xlu0 %53
    %vm55 = vcmp.eq.s32.totalorder %v27, %v54
    %vm56 = vmor %vm51, %vm55
    %57 = vset.pattern.permute.xlu0 6
    %58 = vperm.xlu0 %57, %v25
    %v59 = vpop.permute.xlu0 %58
    %vm60 = vcmp.eq.s32.totalorder %v27, %v59
    %vm61 = vmor %vm56, %vm60
    %62 = vset.pattern.permute.xlu0 7
    %63 = vperm.xlu0 %62, %v25
    %v64 = vpop.permute.xlu0 %63
    %vm65 = vcmp.eq.s32.totalorder %v27, %v64
    %vm66 = vmor %vm61, %vm65
    %v67 = vsel %vm66, 1, 0
    %v68 = vcvt.s32.f32 %v67
    %v69 = vmax.f32 %v24, 0.0
    %v70 = vmul.f32 %v24, %v68
    %v71 = vsub.f32 %v69, %v70
    %v72 = vand.u32 2147483647, %v24
    %v73 = vsub.f32 0.0, %v72
    %v74 = vmul.f32 %v73, 1.442695
    %v75 = vpow.pop %v74
    %v76 = vadd.f32 %v75, 1.0
    %v77 = vlog2.pop %v76
    %v78 = vmul.f32 %v77, 0.6931472
    %v79 = vmul.f32 -0.5, %v75
    %v80 = vadd.f32 %v79, 1.0
    %v81 = vmul.f32 %v80, %v75
    %v82 = vand.u32 2147483647, %v75
    %vm83 = vcmp.lt.f32.partialorder %v82, 0.0004427343
    %v84 = vsel %vm83, %v81, %v78
    %v85 = vadd.f32 %v71, %v84
    %vm86 = vcmask 1041408
    %v87 = vsel %vm86, %v85, 0.0
    %v88 = vrot.slane %v87, 4
    %v89 = vadd.f32 %v87, %v88
    %v90 = vrot.slane %v89, 2
    %v91 = vadd.f32 %v89, %v90
    %v92 = vrot.slane %v91, 1
    %v93 = vadd.f32 %v91, %v92
    %94 = vst [vmem:[#allocation5] sm:$0x1] %v93
    // Predicated region
    $region14: #{tpu_custom_call.1} parent=1 // pred_check
      _
    $region15: #{tpu_custom_call.1} parent=1 // pred_check_branch
      %96 = sbr.rel (0) target = $region17
    $region16: #{tpu_custom_call.1} parent=1 // pred_region
      %s98 = ssub.s32 16, 16
      %99 = vsyncadd [#allocation4], %s98
      %s101 = sshll.u32 [#allocation5], 4
      %s102 = int_to_ptr.vmem [resolvable:$true] %s101
      %104 = dma.vmem_to_hbm [thread:$0]  %s102, 16, %s2, [#allocation4]
    $region17: #{tpu_custom_call.1} parent=1 // pred_fallthru
      _
    // Predicated region
    $region18: #{tpu_custom_call.1} parent=1 // pred_check
      _
    $region19: #{tpu_custom_call.1} parent=1 // pred_check_branch
      %106 = sbr.rel (0) target = $region21
    $region20: #{tpu_custom_call.1} parent=1 // pred_region
      %107 = dma.done [#allocation4], 16
    $region21: #{tpu_custom_call.1} parent=1 // pred_fallthru
      _
    %108 = vsyncpa [#allocation3], 1
    %109 = vsyncpa [#allocation4], 1

</llo_original>
